<compile_context>
chip_gen: v7x
topology: tpu7x:2x2x1
jax: 0.10.0
libtpu: 0.0.40
codegen_flags: <defaults>
</compile_context>

<pallas_src>
import jax
import jax.numpy as jnp
import numpy as np
from jax.experimental import pallas as pl
from jax.experimental.pallas import tpu as pltpu


def _mc_head_kernel(n_rows: int, tbc: int):
    """n_rows = B*C sequences total; tbc = sequences gathered per grid step."""

    def kernel(idx_ref, h_hbm, w_ref, b_ref, out_ref, rows, sem):
        # idx_ref : SMEM (n_rows,) int32 -- flat index of each sequence's clf row in (B*C*S, E)
        # h_hbm   : ANY/HBM ref (B*C*S, E), native dtype -- gathered row by row via DMA
        # w_ref   : VMEM (E, 1) -- Linear(E, 1) weight, resident across steps
        # b_ref   : SMEM (1,) f32 -- Linear bias
        # out_ref : VMEM (1, tbc, 1) f32 output block
        # rows    : VMEM (tbc, E) scratch -- gathered clf rows (native dtype)
        # sem     : DMA semaphore (1,) shared by all row copies of this tile
        base = pl.program_id(0) * tbc

        # Issue all row gathers back-to-back; they run concurrently on the DMA engine.
        @pl.loop(0, tbc)
        def _issue(r):
            row = jnp.minimum(base + r, n_rows - 1)  # tail tile: clamp (dupes sliced off later)
            pltpu.make_async_copy(h_hbm.at[idx_ref[row]], rows.at[r], sem.at[0]).start()

        # Wait for all of them (same-size copies on one sem -> one wait per copy).
        @pl.loop(0, tbc)
        def _wait(r):
            pltpu.make_async_copy(h_hbm.at[0], rows.at[0], sem.at[0]).wait()

        # Linear(E, 1): native-dtype MXU matmul, f32 accumulate (no full-tile cast).
        logits = jnp.dot(rows[...], w_ref[...], preferred_element_type=jnp.float32)  # (tbc, 1)
        out_ref[...] = (logits + b_ref[0])[None, :, :]                                # (1, tbc, 1)

    return kernel


def multiple_choice_head_forward(h, x, weight, bias, clf_token, *, target_gather_bytes=512 * 1024):
    """h: (B, C, S, E) activations (any float dtype); x: (B, C, S, >=1) int with
    x[..., 0] = token ids; weight: (1, E); bias: (1,).  Returns (B, C) f32 logits."""
    B, C, S, E = h.shape
    N = B * C

    # Only the tiny token-id tensor is read on the host side; h is left in HBM as-is.
    h_flat = h.reshape(N * S, E)
    tok = x[..., 0].reshape(N, S).astype(jnp.int32)
    # Module contract: exactly one clf_token per (b, c) sequence -> argmax finds its position.
    clf_pos = jnp.argmax(tok == jnp.int32(clf_token), axis=-1).astype(jnp.int32)      # (N,)
    row_idx = jnp.arange(N, dtype=jnp.int32) * jnp.int32(S) + clf_pos                 # flat rows

    w2 = weight.reshape(E, 1).astype(h.dtype)     # MXU RHS in the activation dtype
    b2 = bias.reshape(1).astype(jnp.float32)      # scalar bias -> SMEM

    # Sequences gathered per grid step: ~512 KiB of rows when N allows (amortizes per-step
    # overhead), multiple of 8 (sublanes), capped by N rounded up to 8 and by DMA-queue sanity.
    row_bytes = E * h.dtype.itemsize
    tbc = max(8, min(512, target_gather_bytes // max(row_bytes, 1)))
    tbc = max(8, (tbc // 8) * 8)
    tbc = int(min(tbc, ((N + 7) // 8) * 8))
    num_tiles = int(pl.cdiv(N, tbc))

    out = pl.pallas_call(
        _mc_head_kernel(N, tbc),
        out_shape=jax.ShapeDtypeStruct((num_tiles, tbc, 1), jnp.float32),
        grid_spec=pltpu.PrefetchScalarGridSpec(
            num_scalar_prefetch=1,                                  # row_idx -> SMEM before grid
            grid=(num_tiles,),
            in_specs=[
                pl.BlockSpec(memory_space=pl.ANY),                  # h stays in HBM (manual gather)
                pl.BlockSpec((E, 1), lambda i, idx: (0, 0)),        # Linear weight (resident)
                pl.BlockSpec(memory_space=pltpu.MemorySpace.SMEM),  # bias scalar
            ],
            out_specs=pl.BlockSpec((1, tbc, 1), lambda i, idx: (i, 0, 0)),
            scratch_shapes=[
                pltpu.VMEM((tbc, E), h.dtype),                      # gathered clf rows
                pltpu.SemaphoreType.DMA((1,)),                      # shared completion semaphore
            ],
        ),
        # Steps are fully independent.  TODO(synk): pltpu.CORE_PARALLEL on v7x for the 2-TC split.
        compiler_params=pltpu.CompilerParams(dimension_semantics=("parallel",)),
    )(row_idx, h_flat, w2, b2)

    # TODO(synk): nn.Dropout2d is identity in eval mode; training-mode dropout would use
    # pltpu.prng_seed / pltpu.stateful_bernoulli on the gathered rows.
    return out.reshape(num_tiles * tbc)[:N].reshape(B, C)


if __name__ == "__main__":
    B, C, S, E = 2, 4, 16, 128          # batch, n_choices (= x.size(1)), seq, n_embd
    clf_token = 7
    key = jax.random.PRNGKey(0)
    kh, kw, kb, kt, kp = jax.random.split(key, 5)

    h = jax.random.normal(kh, (B, C, S, E), dtype=jnp.float32)

    # Token ids in [10, 50); exactly one clf_token per (b, c) sequence at a random position
    # (the contract the torch head relies on).
    toks = jax.random.randint(kt, (B, C, S), 10, 50, dtype=jnp.int32)
    clf_at = jax.random.randint(kp, (B, C), 0, S, dtype=jnp.int32)
    toks = jnp.where(jnp.arange(S, dtype=jnp.int32)[None, None, :] == clf_at[:, :, None],
                     jnp.int32(clf_token), toks)
    positions = jnp.broadcast_to(jnp.arange(S, dtype=jnp.int32), (B, C, S))
    x = jnp.stack([toks, positions], axis=-1)              # (B, C, S, 2)

    # Parameters mirroring the module __init__: weight ~ N(0, 0.02), bias ~ N(0, 1).
    weight = 0.02 * jax.random.normal(kw, (1, E), dtype=jnp.float32)
    bias = jax.random.normal(kb, (1,), dtype=jnp.float32)

    out = multiple_choice_head_forward(h, x, weight, bias, clf_token)
    jax.block_until_ready(out)

    # Pure-numpy reference of the PyTorch forward (dropout = identity in eval).
    h_np = np.asarray(h).reshape(-1, E)
    flat_np = np.asarray(x)[..., 0].reshape(-1)
    sel = h_np[flat_np == clf_token, :]                     # (B*C, E)
    ref = (sel @ np.asarray(weight).T + np.asarray(bias)).reshape(-1, C)   # (B, C)

    assert out.shape == ref.shape, (out.shape, ref.shape)
    assert np.allclose(np.asarray(out), ref, rtol=2e-3, atol=2e-3), (np.asarray(out), ref)
    print("KERNEL_OK")
</pallas_src>

<mosaic_0001>
module attributes {stable_mosaic.version = 11 : i64} {
  func.func @kernel(%arg0: i32, %arg1: memref<8xi32, #tpu.memory_space<smem>>, %arg2: memref<128x128xf32, #tpu.memory_space<any>>, %arg3: memref<128x1xf32, #tpu.memory_space<vmem>>, %arg4: memref<1xf32, #tpu.memory_space<smem>>, %arg5: memref<1x8x1xf32, #tpu.memory_space<vmem>>, %arg6: memref<8x128xf32, #tpu.memory_space<vmem>>, %arg7: memref<1x!tpu.dma_semaphore, #tpu.memory_space<semaphore_mem>>) attributes {dimension_semantics = [#tpu.dimension_semantics<parallel>], iteration_bounds = array<i64: 1>, scalar_prefetch = 1 : i64, scratch_operands = 2 : i64, tpu.core_type = #tpu.core_type<tc>, window_params = [{}, {pipeline_mode = #tpu.pipeline_mode<synchronous>, transform_indices = @transform_1, window_bounds = array<i64: 128, 1>}, {transform_indices = @transform_2, window_bounds = array<i64: 1>}, {transform_indices = @transform_3, window_bounds = array<i64: 1, 8, 1>}]} {
    %c8_i32 = arith.constant 8 : i32
    %0 = arith.muli %arg0, %c8_i32 : i32
    %c0_i32 = arith.constant 0 : i32
    %c8_i32_0 = arith.constant 8 : i32
    %1 = arith.addi %c0_i32, %c8_i32_0 : i32
    %c1_i32 = arith.constant 1 : i32
    scf.for %arg8 = %c0_i32 to %1 step %c1_i32  : i32 {
      %c1_i32_12 = arith.constant 1 : i32
      %11 = arith.muli %arg8, %c1_i32_12 : i32
      %c0_i32_13 = arith.constant 0 : i32
      %12 = arith.addi %c0_i32_13, %11 : i32
      %13 = arith.addi %0, %12 : i32
      %c7_i32 = arith.constant 7 : i32
      %14 = arith.minsi %13, %c7_i32 : i32
      %15 = arith.index_cast %14 : i32 to index
      %16 = memref.load %arg1[%15] : memref<8xi32, #tpu.memory_space<smem>>
      %c0_i32_14 = arith.constant 0 : i32
      %c0_i32_15 = arith.constant 0 : i32
      %17 = tpu.memref_slice %arg2[%16, %c0_i32_15] : memref<128x128xf32, #tpu.memory_space<any>> -> memref<1x128xf32, #tpu.memory_space<any>>
      %18 = tpu.memref_squeeze %17 : memref<1x128xf32, #tpu.memory_space<any>> -> memref<128xf32, #tpu.memory_space<any>>
      %c0_i32_16 = arith.constant 0 : i32
      %19 = tpu.memref_slice %arg6[%12, %c0_i32_16] : memref<8x128xf32, #tpu.memory_space<vmem>> -> memref<1x128xf32, #tpu.memory_space<vmem>>
      %20 = tpu.memref_squeeze %19 : memref<1x128xf32, #tpu.memory_space<vmem>> -> memref<128xf32, #tpu.memory_space<vmem>>
      %21 = tpu.memref_slice %arg7[%c0_i32_14] : memref<1x!tpu.dma_semaphore, #tpu.memory_space<semaphore_mem>> -> memref<1x!tpu.dma_semaphore, #tpu.memory_space<semaphore_mem>>
      %22 = tpu.memref_squeeze %21 : memref<1x!tpu.dma_semaphore, #tpu.memory_space<semaphore_mem>> -> memref<!tpu.dma_semaphore, #tpu.memory_space<semaphore_mem>>
      tpu.enqueue_dma source(%18 : memref<128xf32, #tpu.memory_space<any>>) target(%20 : memref<128xf32, #tpu.memory_space<vmem>>) target_semaphore(%22 : memref<!tpu.dma_semaphore, #tpu.memory_space<semaphore_mem>>)
    }
    %c8_i32_1 = arith.constant 8 : i32
    %c0_i32_2 = arith.constant 0 : i32
    %c8_i32_3 = arith.constant 8 : i32
    %2 = arith.addi %c0_i32_2, %c8_i32_3 : i32
    %c1_i32_4 = arith.constant 1 : i32
    scf.for %arg8 = %c0_i32_2 to %2 step %c1_i32_4  : i32 {
      %c0_i32_12 = arith.constant 0 : i32
      %c0_i32_13 = arith.constant 0 : i32
      %c0_i32_14 = arith.constant 0 : i32
      %c0_i32_15 = arith.constant 0 : i32
      %11 = tpu.memref_slice %arg2[%c0_i32_12, %c0_i32_15] : memref<128x128xf32, #tpu.memory_space<any>> -> memref<1x128xf32, #tpu.memory_space<any>>
      %12 = tpu.memref_squeeze %11 : memref<1x128xf32, #tpu.memory_space<any>> -> memref<128xf32, #tpu.memory_space<any>>
      %c0_i32_16 = arith.constant 0 : i32
      %13 = tpu.memref_slice %arg6[%c0_i32_13, %c0_i32_16] : memref<8x128xf32, #tpu.memory_space<vmem>> -> memref<1x128xf32, #tpu.memory_space<vmem>>
      %14 = tpu.memref_squeeze %13 : memref<1x128xf32, #tpu.memory_space<vmem>> -> memref<128xf32, #tpu.memory_space<vmem>>
      %15 = tpu.memref_slice %arg7[%c0_i32_14] : memref<1x!tpu.dma_semaphore, #tpu.memory_space<semaphore_mem>> -> memref<1x!tpu.dma_semaphore, #tpu.memory_space<semaphore_mem>>
      %16 = tpu.memref_squeeze %15 : memref<1x!tpu.dma_semaphore, #tpu.memory_space<semaphore_mem>> -> memref<!tpu.dma_semaphore, #tpu.memory_space<semaphore_mem>>
      tpu.wait_dma2 semaphore(%16 : memref<!tpu.dma_semaphore, #tpu.memory_space<semaphore_mem>>) src(%12 : memref<128xf32, #tpu.memory_space<any>>) dst(%14 : memref<128xf32, #tpu.memory_space<vmem>>)
    }
    %c0 = arith.constant 0 : index
    %c0_5 = arith.constant 0 : index
    %3 = vector.load %arg6[%c0, %c0_5] : memref<8x128xf32, #tpu.memory_space<vmem>>, vector<8x128xf32>
    %c0_6 = arith.constant 0 : index
    %c0_7 = arith.constant 0 : index
    %4 = vector.load %arg3[%c0_6, %c0_7] : memref<128x1xf32, #tpu.memory_space<vmem>>, vector<128x1xf32>
    %cst = arith.constant dense<0.000000e+00> : vector<8x1xf32>
    %5 = tpu.matmul %3, %4, %cst {dimension_numbers = #tpu.dot_dimension_numbers<[1], [0], [0], [1], [0, 0, 1, 1], [], []>} : vector<8x128xf32>, vector<128x1xf32>, vector<8x1xf32> -> vector<8x1xf32>
    %c0_8 = arith.constant 0 : index
    %6 = memref.load %arg4[%c0_8] : memref<1xf32, #tpu.memory_space<smem>>
    %7 = vector.broadcast %6 : f32 to vector<8x1xf32>
    %8 = arith.addf %5, %7 : vector<8x1xf32>
    %9 = vector.shape_cast %8 : vector<8x1xf32> to vector<1x8x1xf32>
    %c0_9 = arith.constant 0 : index
    %c0_10 = arith.constant 0 : index
    %c0_11 = arith.constant 0 : index
    %10 = vector.load %arg5[%c0_9, %c0_10, %c0_11] : memref<1x8x1xf32, #tpu.memory_space<vmem>>, vector<1x8x1xf32>
    tpu.vector_store %arg5[%c0_9, %c0_10, %c0_11], %9 {strides = array<i32>} : memref<1x8x1xf32, #tpu.memory_space<vmem>>, vector<1x8x1xf32>,
    return
  }
  func.func @transform_1(%arg0: i32, %arg1: memref<8xi32, #tpu.memory_space<smem>>) -> (i32, i32) {
    %c0_i32 = arith.constant 0 : i32
    %c0_i32_0 = arith.constant 0 : i32
    %c0_i32_1 = arith.constant 0 : i32
    return %c0_i32, %c0_i32_0 : i32, i32
  }
  func.func @transform_2(%arg0: i32, %arg1: memref<8xi32, #tpu.memory_space<smem>>) -> i32 {
    %c0_i32 = arith.constant 0 : i32
    %c0_i32_0 = arith.constant 0 : i32
    return %c0_i32 : i32
  }
  func.func @transform_3(%arg0: i32, %arg1: memref<8xi32, #tpu.memory_space<smem>>) -> (i32, i32, i32) {
    %c0_i32 = arith.constant 0 : i32
    %c0_i32_0 = arith.constant 0 : i32
    %c0_i32_1 = arith.constant 0 : i32
    return %arg0, %c0_i32, %c0_i32_0 : i32, i32, i32
  }
}

</mosaic_0001>

<llo_original>
// kernel: tpu_custom_call.1
$region0: #{tpu_custom_call.1}
  #allocation0 [shape = 'u32[]', space=smem, size = 0x4, offset = 0x4, fixed_abs, tag = 'smem constant byte address 0x4 - core index']
  #allocation1 [shape = 'u32[144,128]{1,0:T(1,128)}', space=vmem, size = 0x12000, scoped, tag = 'internal scratch']
  #allocation2 [shape = 'f32[8,128]{1,0:T(8,128)}', space=vmem, size = 0x1000, scoped, tag = 'scratch operand']
  #allocation3 [shape = 's32[1]{0}', space=sflag, size = 0x4, scoped, tag = 'scratch operand']
  #allocation4 [shape = 's32[1]{0}', space=sflag, size = 0x4, scoped, tag = 'scoped memory for tpu_custom_call.1']
  #allocation5 [shape = 'u8[512]{0}', space=smem, size = 0x200, scoped, tag = 'prefetched SMEM operand 0']
  #allocation6 [shape = 'f32[1]{0:T(128)S(6)}', space=smem, size = 0x200, scoped, tag = 'scoped memory for tpu_custom_call.1']
  #allocation7 [shape = 's32[]', space=sflag, size = 0x4, offset = 0, fixed_abs, tag = 'sflag constant byte address 0x0 - dummy sync flag']
  %s0 = inlined_call_operand.vmem [shape: s32[8], index: 0, kind: input, shape index: {}]
  %s1 = inlined_call_operand.vmem [shape: f32[128,128], index: 1, kind: input, shape index: {}]
  %s2 = inlined_call_operand.vmem [shape: f32[128,1], index: 2, kind: input, shape index: {}]
  %s3 = inlined_call_operand.<no memory space> [shape: f32[1], index: 3, kind: input, shape index: {}]
  %s4 = inlined_call_operand.vmem [shape: f32[1,8,1], index: 4, kind: output, shape index: {}]
  %s5 = sld [smem:[#allocation0]]
  $region62: #{tpu_custom_call.1} parent=0
    _
  %s7 = ssub.s32 1, %s5
  %s8 = scalar_select 0, %s7, %s5
  %s9 = sshll.u32 %s0, 4
  %s10 = int_to_ptr.vmem [resolvable:$true] %s9
  %12 = dma.vmem_to_smem %s10, 16, [#allocation5], [#allocation4]
  %13 = sst [smem:[#allocation6]] %s3
  %14 = dma.done [#allocation4], 16
  %15 = sfence
  // Predicated region
  $region2: #{tpu_custom_call.1} parent=0 // pred_check
    _
  $region3: #{tpu_custom_call.1} parent=0 // pred_check_branch
    %17 = sbr.rel (0) target = $region5
  $region4: #{tpu_custom_call.1} parent=0 // pred_region
    _
  $region5: #{tpu_custom_call.1} parent=0 // pred_fallthru
    _
  // Predicated region
  $region6: #{tpu_custom_call.1} parent=0 // pred_check
    _
  $region7: #{tpu_custom_call.1} parent=0 // pred_check_branch
    %19 = sbr.rel (0) target = $region9
  $region8: #{tpu_custom_call.1} parent=0 // pred_region
    _
  $region9: #{tpu_custom_call.1} parent=0 // pred_fallthru
    _
  %s20 = smul.u32 0, 8
  loop: start=0, step=1, limit=8
  $region10: #{tpu_custom_call.1} parent=0 // loop_pre_header
    _
  $region11: #{tpu_custom_call.1} parent=0 // loop_header
    %s22 = sphi 0, %s26
    %p23 = scmp.ge.s32.totalorder %s22, 8
  $region12: #{tpu_custom_call.1} parent=0 // loop_header_branch
    %25 = sbr.rel (%p23) target = $region16
  $region13: #{tpu_custom_call.1} parent=0 // loop_body
    %s27 = sadd.s32 %s20, %s22
    %p28 = scmp.lt.s32.totalorder %s27, 7
    %s29 = scalar_select %p28, %s27, 7
    %s30 = sld [smem:[#allocation5 + %s29]]
    %s31 = scalar_lea.vmem %s1, %s30
    %s32 = scalar_lea.vmem [#allocation2], %s22
    %p34 = scmp.lt.u32.totalorder 1, 8
    %p35 = pneg %p34
    // Predicated region
    $region17: #{tpu_custom_call.1} parent=13 // pred_check
      _
    $region18: #{tpu_custom_call.1} parent=13 // pred_check_branch
      %37 = sbr.rel (%p34) target = $region20
    $region19: #{tpu_custom_call.1} parent=13 // pred_region
      %s52 = sand.u32 1, 7
      %p53 = scmp.eq.s32.totalorder %s52, 0
      %p54 = pneg %p53
      // Predicated region
      $region32: #{tpu_custom_call.1} parent=19 // pred_check
        _
      $region33: #{tpu_custom_call.1} parent=19 // pred_check_branch
        %56 = sbr.rel (%p53) target = $region35
      $region34: #{tpu_custom_call.1} parent=19 // pred_region
        %s57 = sand.u32 1, 7
        %s58 = ssub.s32 1, %s57
        %s59 = scalar_lea.vmem %s31, %s58
        %s60 = ssub.s32 1, %s57
        %s61 = scalar_lea.vmem %s32, %s60 [#allocation2]
        %s62 = sshllo.u32 0, %s57
        loop: start=0, step=1, limit=1
        $region36: #{tpu_custom_call.1} parent=34 // loop_pre_header
          _
        $region37: #{tpu_custom_call.1} parent=34 // loop_header
          %s64 = sphi 0, %s68
          %p65 = scmp.ge.s32.totalorder %s64, 1
          %s69 = sphi %s59, %s59
          %s70 = sphi %s61, %s61
        $region38: #{tpu_custom_call.1} parent=34 // loop_header_branch
          %67 = sbr.rel (%p65) target = $region42
        $region39: #{tpu_custom_call.1} parent=34 // loop_body
          %v71 = vld [vmem:[%s69] sm:%s62]
          %72 = vst [vmem:[%s70] sm:%s62] %v71
        $region40: #{tpu_custom_call.1} parent=34 // loop_footer
          %s68 = sadd.s32 1, %s64
        $region41: #{tpu_custom_call.1} parent=34 // loop_footer_branch
          %63 = sbr.rel target = $region37
        $region42: #{tpu_custom_call.1} parent=34 // loop_exit
          _
      $region35: #{tpu_custom_call.1} parent=19 // pred_fallthru
        _
    $region20: #{tpu_custom_call.1} parent=13 // pred_fallthru
      _
    // Predicated region
    $region21: #{tpu_custom_call.1} parent=13 // pred_check
      %p38 = pneg %p34
    $region22: #{tpu_custom_call.1} parent=13 // pred_check_branch
      %40 = sbr.rel (%p38) target = $region24
    $region23: #{tpu_custom_call.1} parent=13 // pred_region
      %s41 = sshllo.u32 0, 1
      loop: start=0, step=1, limit=1
      $region25: #{tpu_custom_call.1} parent=23 // loop_pre_header
        _
      $region26: #{tpu_custom_call.1} parent=23 // loop_header
        %s43 = sphi 0, %s47
        %p44 = scmp.ge.s32.totalorder %s43, 1
        %s48 = sphi %s31, %s31
        %s49 = sphi %s32, %s32
      $region27: #{tpu_custom_call.1} parent=23 // loop_header_branch
        %46 = sbr.rel (%p44) target = $region31
      $region28: #{tpu_custom_call.1} parent=23 // loop_body
        %v50 = vld [vmem:[%s48] sm:%s41]
        %51 = vst [vmem:[%s49] sm:%s41] %v50
      $region29: #{tpu_custom_call.1} parent=23 // loop_footer
        %s47 = sadd.s32 1, %s43
      $region30: #{tpu_custom_call.1} parent=23 // loop_footer_branch
        %42 = sbr.rel target = $region26
      $region31: #{tpu_custom_call.1} parent=23 // loop_exit
        _
    $region24: #{tpu_custom_call.1} parent=13 // pred_fallthru
      _
    // Predicated region
    $region43: #{tpu_custom_call.1} parent=13 // pred_check
      _
    $region44: #{tpu_custom_call.1} parent=13 // pred_check_branch
      %75 = sbr.rel (0) target = $region46
    $region45: #{tpu_custom_call.1} parent=13 // pred_region
      %76 = vsyncadd [#allocation3], 16
    $region46: #{tpu_custom_call.1} parent=13 // pred_fallthru
      _
  $region14: #{tpu_custom_call.1} parent=0 // loop_footer
    %s26 = sadd.s32 1, %s22
  $region15: #{tpu_custom_call.1} parent=0 // loop_footer_branch
    %21 = sbr.rel target = $region11
  $region16: #{tpu_custom_call.1} parent=0 // loop_exit
    _
  loop: start=0, step=1, limit=8
  $region47: #{tpu_custom_call.1} parent=0 // loop_pre_header
    _
  $region48: #{tpu_custom_call.1} parent=0 // loop_header
    %s78 = sphi 0, %s82
    %p79 = scmp.ge.s32.totalorder %s78, 8
  $region49: #{tpu_custom_call.1} parent=0 // loop_header_branch
    %81 = sbr.rel (%p79) target = $region53
  $region50: #{tpu_custom_call.1} parent=0 // loop_body
    %84 = dma.done [#allocation3], 16
  $region51: #{tpu_custom_call.1} parent=0 // loop_footer
    %s82 = sadd.s32 1, %s78
  $region52: #{tpu_custom_call.1} parent=0 // loop_footer_branch
    %77 = sbr.rel target = $region48
  $region53: #{tpu_custom_call.1} parent=0 // loop_exit
    _
  %v85 = vld [vmem:[#allocation2] sm:$0xff]
  %v86 = vld [vmem:[%s2] sm:$0xff]
  %v87 = vld [vmem:[%s2 + $0x8] sm:$0xff]
  %v88 = vld [vmem:[%s2 + $0x10] sm:$0xff]
  %v89 = vld [vmem:[%s2 + $0x18] sm:$0xff]
  %v90 = vld [vmem:[%s2 + $0x20] sm:$0xff]
  %v91 = vld [vmem:[%s2 + $0x28] sm:$0xff]
  %v92 = vld [vmem:[%s2 + $0x30] sm:$0xff]
  %v93 = vld [vmem:[%s2 + $0x38] sm:$0xff]
  %v94 = vld [vmem:[%s2 + $0x40] sm:$0xff]
  %v95 = vld [vmem:[%s2 + $0x48] sm:$0xff]
  %v96 = vld [vmem:[%s2 + $0x50] sm:$0xff]
  %v97 = vld [vmem:[%s2 + $0x58] sm:$0xff]
  %v98 = vld [vmem:[%s2 + $0x60] sm:$0xff]
  %v99 = vld [vmem:[%s2 + $0x68] sm:$0xff]
  %v100 = vld [vmem:[%s2 + $0x70] sm:$0xff]
  %v101 = vld [vmem:[%s2 + $0x78] sm:$0xff]
  %s102 = sld [smem:[#allocation6]]
  %v103 = vstv %s102
  %104 = vmatprep.subr.mxu0 0.0
  %105 = vmatpush1.msra.mxu0 %v86
  %106 = vmatprep.subr.mxu0 0.0
  %107 = vmatpush1.msra.mxu0 %v87
  %108 = vmatprep.subr.mxu0 0.0
  %109 = vmatpush1.msra.mxu0 %v88
  %110 = vmatprep.subr.mxu0 0.0
  %111 = vmatpush1.msra.mxu0 %v89
  %112 = vmatprep.subr.mxu0 0.0
  %113 = vmatpush1.msra.mxu0 %v90
  %114 = vmatprep.subr.mxu0 0.0
  %115 = vmatpush1.msra.mxu0 %v91
  %116 = vmatprep.subr.mxu0 0.0
  %117 = vmatpush1.msra.mxu0 %v92
  %118 = vmatprep.subr.mxu0 0.0
  %119 = vmatpush1.msra.mxu0 %v93
  %120 = vmatprep.subr.mxu0 0.0
  %121 = vmatpush1.msra.mxu0 %v94
  %122 = vmatprep.subr.mxu0 0.0
  %123 = vmatpush1.msra.mxu0 %v95
  %124 = vmatprep.subr.mxu0 0.0
  %125 = vmatpush1.msra.mxu0 %v96
  %126 = vmatprep.subr.mxu0 0.0
  %127 = vmatpush1.msra.mxu0 %v97
  %128 = vmatprep.subr.mxu0 0.0
  %129 = vmatpush1.msra.mxu0 %v98
  %130 = vmatprep.subr.mxu0 0.0
  %131 = vmatpush1.msra.mxu0 %v99
  %132 = vmatprep.subr.mxu0 0.0
  %133 = vmatpush1.msra.mxu0 %v100
  %134 = vmatprep.subr.mxu0 0.0
  %135 = vmatpush1.msra.mxu0 %v101
  %136 = vmatprep.subr.mxu0 0.0
  %137 = vmatpush1.msra.mxu0 0.0
  %138 = vmatprep.subr.mxu0 0.0
  %139 = vmatpush1.msra.mxu0 0.0
  %140 = vmatprep.subr.mxu0 0.0
  %141 = vmatpush1.msra.mxu0 0.0
  %142 = vmatprep.subr.mxu0 0.0
  %143 = vmatpush1.msra.mxu0 0.0
  %144 = vmatprep.subr.mxu0 0.0
  %145 = vmatpush1.msra.mxu0 0.0
  %146 = vmatprep.subr.mxu0 0.0
  %147 = vmatpush1.msra.mxu0 0.0
  %148 = vmatprep.subr.mxu0 0.0
  %149 = vmatpush1.msra.mxu0 0.0
  %150 = vmatprep.subr.mxu0 0.0
  %151 = vmatpush1.msra.mxu0 0.0
  %152 = vmatprep.subr.mxu0 0.0
  %153 = vmatpush1.msra.mxu0 0.0
  %154 = vmatprep.subr.mxu0 0.0
  %155 = vmatpush1.msra.mxu0 0.0
  %156 = vmatprep.subr.mxu0 0.0
  %157 = vmatpush1.msra.mxu0 0.0
  %158 = vmatprep.subr.mxu0 0.0
  %159 = vmatpush1.msra.mxu0 0.0
  %160 = vmatprep.subr.mxu0 0.0
  %161 = vmatpush1.msra.mxu0 0.0
  %162 = vmatprep.subr.mxu0 0.0
  %163 = vmatpush1.msra.mxu0 0.0
  %164 = vmatprep.subr.mxu0 0.0
  %165 = vmatpush1.msra.mxu0 0.0
  %166 = vmatprep.subr.mxu0 0.0
  %167 = vmatpush1.msra.mxu0 0.0
  %168 = vmatprep.mubr.f32.mxu0 0.0
  %169 = vmatmul.mubr.f32.gmra.mrb[0].mxu0 %v85
  %v170 = vpop.f32.mrb[0].mxu0
  %v171 = vadd.f32 %v103, %v170
  %v172 = vpop.f32.mrb[0].mxu0
  %173 = vdwg.mxu0
  %vm174 = vcmask 7168
  %175 = vst.msk [vmem:[%s4] sm:$0xff] %vm174, %v171
  // Predicated region
  $region54: #{tpu_custom_call.1} parent=0 // pred_check
    _
  $region55: #{tpu_custom_call.1} parent=0 // pred_check_branch
    %177 = sbr.rel (0) target = $region57
  $region56: #{tpu_custom_call.1} parent=0 // pred_region
    _
  $region57: #{tpu_custom_call.1} parent=0 // pred_fallthru
    _
  // Predicated region
  $region58: #{tpu_custom_call.1} parent=0 // pred_check
    _
  $region59: #{tpu_custom_call.1} parent=0 // pred_check_branch
    %179 = sbr.rel (0) target = $region61
  $region60: #{tpu_custom_call.1} parent=0 // pred_region
    _
  $region61: #{tpu_custom_call.1} parent=0 // pred_fallthru
    _
  %180 = vsyncmov [#allocation3]
  %s181 = vpop.sfrf %180
  %p182 = scmp.eq.s32.totalorder %s181, 0
  %p183 = pneg %p182
  %185 = shalt.err (%p183)

</llo_original>
